<compile_context>
chip_gen: v7x
topology: tpu7x:2x2x1
jax: 0.10.0
libtpu: 0.0.40
codegen_flags: <defaults>
</compile_context>

<pallas_src>
import functools

import jax
import jax.numpy as jnp
from jax.experimental import pallas as pl
from jax.experimental.pallas import tpu as pltpu


# ----------------------------- Pallas kernel -------------------------------


def _basic_block_kernel(H, x_ref, b1_ref, b2_ref, sh1_ref, sh2_ref, o_ref):
    # x_ref:   (M, WC)       M = Nb*H rows of flattened channels-last input, f32
    # b1_ref:  (3*WC, WC)    conv1 banded weights, dy-stacked along K, bf16
    # b2_ref:  (3*WC, WC)    conv2 banded weights, dy-stacked along K, bf16
    # sh1_ref: (1, WC)       BN1 shift (tiled over W), f32
    # sh2_ref: (1, WC)       BN2 shift (tiled over W), f32
    # o_ref:   (M, WC)       f32 output
    M, WC = x_ref.shape
    x = x_ref[...]                                            # (M, WC) f32

    # Per-image H boundaries (rows 0 and H-1 of each stacked image).  Computed
    # once and reused by both convs (JAX does not CSE broadcasts).
    row = jax.lax.broadcasted_iota(jnp.int32, (M, WC), 0)
    is_top = (row % H) == 0
    is_bot = (row % H) == (H - 1)

    def conv3x3_bn(a, b_ref, sh_ref):
        # H-direction SAME padding: output row h needs input rows h-1, h, h+1
        # (zero outside each image).  pltpu.roll = XLU sublane rotate (free
        # slot here); jnp.where masks the per-image boundary rows so stacked
        # images never leak into each other.
        a_dn = jnp.where(is_top, 0.0, pltpu.roll(a, 1, axis=0))      # a[h-1]
        a_up = jnp.where(is_bot, 0.0, pltpu.roll(a, M - 1, axis=0))  # a[h+1]
        # Stack the three dy-inputs along K -> one (M, 3*WC) x (3*WC, WC)
        # bf16 MXU matmul per conv (K=384 fills the MXU, single result pop).
        ak = jnp.concatenate([a_dn, a, a_up], axis=-1).astype(jnp.bfloat16)
        acc = jnp.dot(ak, b_ref[...], preferred_element_type=jnp.float32)
        return acc + sh_ref[...]                              # BN shift

    h = jnp.maximum(conv3x3_bn(x, b1_ref, sh1_ref), 0.0)      # conv1+bn1+relu
    y = conv3x3_bn(h, b2_ref, sh2_ref) + x                    # conv2+bn2+res
    o_ref[...] = jnp.maximum(y, 0.0).astype(o_ref.dtype)      # final relu


# ------------------------------ Host wrappers -------------------------------


def _fold_bn(gamma, beta, mean, var, eps=1e-5):
    scale = gamma / jnp.sqrt(var + eps)
    shift = beta - mean * scale
    return scale.astype(jnp.float32), shift.astype(jnp.float32)


def _build_band(w_hwio, scale, W):
    """Per-dy block-banded (Toeplitz) matrices for a 3x3 SAME conv.

    Returns B of shape (3, W*Cin, W*Cout) with
      B[dy, wi*Cin + ci, wo*Cout + co] = w[dy, wi-wo+1, ci, co] * scale[co]
    when 0 <= wi-wo+1 <= 2, else 0 (zero blocks implement the W padding).
    """
    Cin, Cout = w_hwio.shape[2], w_hwio.shape[3]
    ws = (w_hwio * scale[None, None, None, :]).astype(jnp.float32)  # fold BN
    wi = jnp.arange(W)
    wo = jnp.arange(W)
    dx = wi[:, None] - wo[None, :] + 1                    # (W, W)
    valid = ((dx >= 0) & (dx < 3)).astype(jnp.float32)
    dxc = jnp.clip(dx, 0, 2)
    blocks = ws[:, dxc, :, :] * valid[None, :, :, None, None]  # (3,W,W,Cin,Cout)
    B = blocks.transpose(0, 1, 3, 2, 4).reshape(3, W * Cin, W * Cout)
    return B


def prepare_block_params(params, W, eps=1e-5):
    """One-time (parameter-load-time) preprocessing: fold BN, build banded
    weights, stack along K in dy order, cast to bf16 for the MXU."""
    s1, b1 = _fold_bn(*params["bn1"], eps)
    s2, b2 = _fold_bn(*params["bn2"], eps)
    C = params["w1"].shape[2]
    WC = W * C
    B1 = _build_band(params["w1"], s1, W).reshape(3 * WC, WC).astype(jnp.bfloat16)
    B2 = _build_band(params["w2"], s2, W).reshape(3 * WC, WC).astype(jnp.bfloat16)
    sh1 = jnp.tile(b1, W).reshape(1, WC)
    sh2 = jnp.tile(b2, W).reshape(1, WC)
    return {"B1": B1, "B2": B2, "sh1": sh1, "sh2": sh2}


def basic_block_forward(x_nchw, prep, *, images_per_step=None):
    """BasicBlock forward (stride=1, downsample=None). NCHW in/out.

    The NCHW<->NHWC transposes only exist to match the torch interface; a full
    network would keep the flat (N*H, W*C) channels-last layout between blocks.
    """
    N, C, H, W = x_nchw.shape
    WC = W * C
    assert WC % 128 == 0, "lane-dense layout requires W*C to be a multiple of 128"

    # NCHW -> NHWC -> flatten (W, C) into lanes and (N, H) into rows.
    x = jnp.transpose(x_nchw, (0, 2, 3, 1)).reshape(N * H, WC)

    if images_per_step is None:
        # Stack images to grow M, but keep >= 2 grid steps so v7x's two
        # TensorCores can both be used via dimension_semantics=("parallel",).
        images_per_step = N // 2 if (N >= 2 and N % 2 == 0) else 1
    Nb = images_per_step
    assert N % Nb == 0
    M = Nb * H

    out = pl.pallas_call(
        functools.partial(_basic_block_kernel, H),
        out_shape=jax.ShapeDtypeStruct((N * H, WC), x.dtype),
        grid=(N // Nb,),
        in_specs=[
            pl.BlockSpec((M, WC), lambda n: (n, 0)),
            pl.BlockSpec((3 * WC, WC), lambda n: (0, 0)),
            pl.BlockSpec((3 * WC, WC), lambda n: (0, 0)),
            pl.BlockSpec((1, WC), lambda n: (0, 0)),
            pl.BlockSpec((1, WC), lambda n: (0, 0)),
        ],
        out_specs=pl.BlockSpec((M, WC), lambda n: (n, 0)),
        compiler_params=pltpu.CompilerParams(
            dimension_semantics=("parallel",)),
    )(x, prep["B1"], prep["B2"], prep["sh1"], prep["sh2"])

    return jnp.transpose(out.reshape(N, H, W, C), (0, 3, 1, 2))  # NHWC -> NCHW


# --------------------------- Pure-JAX reference -----------------------------


def _ref_conv(x, w):
    return jax.lax.conv_general_dilated(
        x, w, window_strides=(1, 1), padding="SAME",
        dimension_numbers=("NHWC", "HWIO", "NHWC"))


def basic_block_ref(x_nchw, params):
    x = jnp.transpose(x_nchw, (0, 2, 3, 1))
    s1, b1 = _fold_bn(*params["bn1"])
    s2, b2 = _fold_bn(*params["bn2"])
    h = jnp.maximum(_ref_conv(x, params["w1"]) * s1 + b1, 0.0)
    o = _ref_conv(h, params["w2"]) * s2 + b2 + x
    o = jnp.maximum(o, 0.0)
    return jnp.transpose(o, (0, 3, 1, 2))


# ----------------------------------- Main ------------------------------------


if __name__ == "__main__":
    key = jax.random.PRNGKey(0)
    k_x, k_w1, k_w2 = jax.random.split(key, 3)

    # inplanes = planes = 8, stride = 1, W*C = 128 (lane-dense); batch 4 so the
    # kernel stacks 2 images per grid step and still has 2 grid steps.
    N, C, H, W = 4, 8, 16, 16
    inplanes = planes = C

    x = jax.random.normal(k_x, (N, C, H, W), dtype=jnp.float32)

    # Conv weights in HWIO layout; deterministic init.
    w1 = 0.1 * jax.random.normal(k_w1, (3, 3, inplanes, planes), jnp.float32)
    w2 = 0.1 * jax.random.normal(k_w2, (3, 3, planes, planes), jnp.float32)

    # Deterministic BatchNorm params (inference): (gamma, beta, mean, var).
    c_idx = jnp.arange(planes, dtype=jnp.float32)
    bn1 = (1.0 + 0.05 * c_idx, 0.02 * c_idx, 0.01 * c_idx, 1.0 + 0.1 * c_idx)
    bn2 = (1.0 - 0.03 * c_idx, -0.01 * c_idx, 0.02 * c_idx, 0.5 + 0.1 * c_idx)

    params = {"w1": w1, "w2": w2, "bn1": bn1, "bn2": bn2}

    # Parameter prep (BN fold, banded weights, bf16 cast) happens ONCE here,
    # outside the jitted forward.
    prep = jax.tree_util.tree_map(jax.block_until_ready,
                                  prepare_block_params(params, W))

    fwd = jax.jit(basic_block_forward)
    out = jax.block_until_ready(fwd(x, prep))

    ref = jax.block_until_ready(basic_block_ref(x, params))
    assert out.shape == (N, C, H, W)
    # bf16 MXU operands (f32 accumulation): expected error ~1e-2 absolute.
    assert jnp.allclose(out, ref, atol=7e-2, rtol=7e-2), "mismatch vs reference"

    print("KERNEL_OK")
</pallas_src>

<mosaic_0001>
module attributes {stable_mosaic.version = 11 : i64} {
  func.func @_basic_block_kernel(%arg0: i32, %arg1: memref<32x128xf32, #tpu.memory_space<vmem>>, %arg2: memref<384x128xbf16, #tpu.memory_space<vmem>>, %arg3: memref<384x128xbf16, #tpu.memory_space<vmem>>, %arg4: memref<1x128xf32, #tpu.memory_space<vmem>>, %arg5: memref<1x128xf32, #tpu.memory_space<vmem>>, %arg6: memref<32x128xf32, #tpu.memory_space<vmem>>) attributes {dimension_semantics = [#tpu.dimension_semantics<parallel>], iteration_bounds = array<i64: 2>, scalar_prefetch = 0 : i64, scratch_operands = 0 : i64, tpu.core_type = #tpu.core_type<tc>, window_params = [{transform_indices = @transform_0, window_bounds = array<i64: 32, 128>}, {pipeline_mode = #tpu.pipeline_mode<synchronous>, transform_indices = @transform_1, window_bounds = array<i64: 384, 128>}, {pipeline_mode = #tpu.pipeline_mode<synchronous>, transform_indices = @transform_2, window_bounds = array<i64: 384, 128>}, {pipeline_mode = #tpu.pipeline_mode<synchronous>, transform_indices = @transform_3, window_bounds = array<i64: 1, 128>}, {pipeline_mode = #tpu.pipeline_mode<synchronous>, transform_indices = @transform_4, window_bounds = array<i64: 1, 128>}, {transform_indices = @transform_5, window_bounds = array<i64: 32, 128>}]} {
    %c0 = arith.constant 0 : index
    %c0_0 = arith.constant 0 : index
    %0 = vector.load %arg1[%c0, %c0_0] : memref<32x128xf32, #tpu.memory_space<vmem>>, vector<32x128xf32>
    %1 = tpu.iota {dimensions = array<i32: 0>} : vector<32x128xi32>
    %c16_i32 = arith.constant 16 : i32
    %c0_i32 = arith.constant 0 : i32
    %2 = arith.cmpi eq, %c16_i32, %c0_i32 : i32
    %c1_i32 = arith.constant 1 : i32
    %3 = arith.select %2, %c1_i32, %c16_i32 : i32
    %4 = vector.broadcast %3 : i32 to vector<32x128xi32>
    %5 = arith.remsi %1, %4 : vector<32x128xi32>
    %c0_i32_1 = arith.constant 0 : i32
    %6 = vector.broadcast %c0_i32_1 : i32 to vector<32x128xi32>
    %7 = arith.cmpi ne, %5, %6 : vector<32x128xi32>
    %c0_i32_2 = arith.constant 0 : i32
    %8 = vector.broadcast %c0_i32_2 : i32 to vector<32x128xi32>
    %9 = arith.cmpi slt, %5, %8 : vector<32x128xi32>
    %c0_i32_3 = arith.constant 0 : i32
    %10 = arith.cmpi slt, %3, %c0_i32_3 : i32
    %11 = vector.broadcast %10 : i1 to vector<32x128xi1>
    %12 = vector.broadcast %11 : vector<32x128xi1> to vector<32x128xi1>
    %13 = arith.xori %9, %12 : vector<32x128xi1>
    %14 = arith.andi %13, %7 : vector<32x128xi1>
    %15 = vector.broadcast %3 : i32 to vector<32x128xi32>
    %16 = arith.addi %5, %15 : vector<32x128xi32>
    %17 = arith.select %14, %16, %5 : vector<32x128xi1>, vector<32x128xi32>
    %c0_i32_4 = arith.constant 0 : i32
    %18 = vector.broadcast %c0_i32_4 : i32 to vector<32x128xi32>
    %19 = arith.cmpi eq, %17, %18 : vector<32x128xi32>
    %c16_i32_5 = arith.constant 16 : i32
    %c0_i32_6 = arith.constant 0 : i32
    %20 = arith.cmpi eq, %c16_i32_5, %c0_i32_6 : i32
    %c1_i32_7 = arith.constant 1 : i32
    %21 = arith.select %20, %c1_i32_7, %c16_i32_5 : i32
    %22 = vector.broadcast %21 : i32 to vector<32x128xi32>
    %23 = arith.remsi %1, %22 : vector<32x128xi32>
    %c0_i32_8 = arith.constant 0 : i32
    %24 = vector.broadcast %c0_i32_8 : i32 to vector<32x128xi32>
    %25 = arith.cmpi ne, %23, %24 : vector<32x128xi32>
    %c0_i32_9 = arith.constant 0 : i32
    %26 = vector.broadcast %c0_i32_9 : i32 to vector<32x128xi32>
    %27 = arith.cmpi slt, %23, %26 : vector<32x128xi32>
    %c0_i32_10 = arith.constant 0 : i32
    %28 = arith.cmpi slt, %21, %c0_i32_10 : i32
    %29 = vector.broadcast %28 : i1 to vector<32x128xi1>
    %30 = vector.broadcast %29 : vector<32x128xi1> to vector<32x128xi1>
    %31 = arith.xori %27, %30 : vector<32x128xi1>
    %32 = arith.andi %31, %25 : vector<32x128xi1>
    %33 = vector.broadcast %21 : i32 to vector<32x128xi32>
    %34 = arith.addi %23, %33 : vector<32x128xi32>
    %35 = arith.select %32, %34, %23 : vector<32x128xi1>, vector<32x128xi32>
    %c15_i32 = arith.constant 15 : i32
    %36 = vector.broadcast %c15_i32 : i32 to vector<32x128xi32>
    %37 = arith.cmpi eq, %35, %36 : vector<32x128xi32>
    %c1_i32_11 = arith.constant 1 : i32
    %38 = tpu.dynamic_rotate %0 by %c1_i32_11 dim 0 : vector<32x128xf32>, i32 -> vector<32x128xf32>
    %cst = arith.constant 0.000000e+00 : f32
    %39 = vector.broadcast %cst : f32 to vector<32x128xf32>
    %40 = arith.select %19, %39, %38 : vector<32x128xi1>, vector<32x128xf32>
    %c31_i32 = arith.constant 31 : i32
    %41 = tpu.dynamic_rotate %0 by %c31_i32 dim 0 : vector<32x128xf32>, i32 -> vector<32x128xf32>
    %cst_12 = arith.constant 0.000000e+00 : f32
    %42 = vector.broadcast %cst_12 : f32 to vector<32x128xf32>
    %43 = arith.select %37, %42, %41 : vector<32x128xi1>, vector<32x128xf32>
    %44 = tpu.concatenate %40, %0, %43 in 1 : vector<32x128xf32>, vector<32x128xf32>, vector<32x128xf32> -> vector<32x384xf32>
    %45 = arith.truncf %44 : vector<32x384xf32> to vector<32x384xbf16>
    %c0_13 = arith.constant 0 : index
    %c0_14 = arith.constant 0 : index
    %46 = vector.load %arg2[%c0_13, %c0_14] : memref<384x128xbf16, #tpu.memory_space<vmem>>, vector<384x128xbf16>
    %cst_15 = arith.constant dense<0.000000e+00> : vector<32x128xf32>
    %47 = tpu.matmul %45, %46, %cst_15 {dimension_numbers = #tpu.dot_dimension_numbers<[1], [0], [0], [1], [0, 0, 1, 1], [], []>} : vector<32x384xbf16>, vector<384x128xbf16>, vector<32x128xf32> -> vector<32x128xf32>
    %c0_16 = arith.constant 0 : index
    %c0_17 = arith.constant 0 : index
    %48 = vector.load %arg4[%c0_16, %c0_17] : memref<1x128xf32, #tpu.memory_space<vmem>>, vector<1x128xf32>
    %49 = vector.broadcast %48 : vector<1x128xf32> to vector<32x128xf32>
    %50 = arith.addf %47, %49 : vector<32x128xf32>
    %cst_18 = arith.constant 0.000000e+00 : f32
    %51 = vector.broadcast %cst_18 : f32 to vector<32x128xf32>
    %52 = arith.maximumf %50, %51 : vector<32x128xf32>
    %c1_i32_19 = arith.constant 1 : i32
    %53 = tpu.dynamic_rotate %52 by %c1_i32_19 dim 0 : vector<32x128xf32>, i32 -> vector<32x128xf32>
    %cst_20 = arith.constant 0.000000e+00 : f32
    %54 = vector.broadcast %cst_20 : f32 to vector<32x128xf32>
    %55 = arith.select %19, %54, %53 : vector<32x128xi1>, vector<32x128xf32>
    %c31_i32_21 = arith.constant 31 : i32
    %56 = tpu.dynamic_rotate %52 by %c31_i32_21 dim 0 : vector<32x128xf32>, i32 -> vector<32x128xf32>
    %cst_22 = arith.constant 0.000000e+00 : f32
    %57 = vector.broadcast %cst_22 : f32 to vector<32x128xf32>
    %58 = arith.select %37, %57, %56 : vector<32x128xi1>, vector<32x128xf32>
    %59 = tpu.concatenate %55, %52, %58 in 1 : vector<32x128xf32>, vector<32x128xf32>, vector<32x128xf32> -> vector<32x384xf32>
    %60 = arith.truncf %59 : vector<32x384xf32> to vector<32x384xbf16>
    %c0_23 = arith.constant 0 : index
    %c0_24 = arith.constant 0 : index
    %61 = vector.load %arg3[%c0_23, %c0_24] : memref<384x128xbf16, #tpu.memory_space<vmem>>, vector<384x128xbf16>
    %cst_25 = arith.constant dense<0.000000e+00> : vector<32x128xf32>
    %62 = tpu.matmul %60, %61, %cst_25 {dimension_numbers = #tpu.dot_dimension_numbers<[1], [0], [0], [1], [0, 0, 1, 1], [], []>} : vector<32x384xbf16>, vector<384x128xbf16>, vector<32x128xf32> -> vector<32x128xf32>
    %c0_26 = arith.constant 0 : index
    %c0_27 = arith.constant 0 : index
    %63 = vector.load %arg5[%c0_26, %c0_27] : memref<1x128xf32, #tpu.memory_space<vmem>>, vector<1x128xf32>
    %64 = vector.broadcast %63 : vector<1x128xf32> to vector<32x128xf32>
    %65 = arith.addf %62, %64 : vector<32x128xf32>
    %66 = arith.addf %65, %0 : vector<32x128xf32>
    %cst_28 = arith.constant 0.000000e+00 : f32
    %67 = vector.broadcast %cst_28 : f32 to vector<32x128xf32>
    %68 = arith.maximumf %66, %67 : vector<32x128xf32>
    %c0_29 = arith.constant 0 : index
    %c0_30 = arith.constant 0 : index
    %69 = vector.load %arg6[%c0_29, %c0_30] : memref<32x128xf32, #tpu.memory_space<vmem>>, vector<32x128xf32>
    tpu.vector_store %arg6[%c0_29, %c0_30], %68 {strides = array<i32>} : memref<32x128xf32, #tpu.memory_space<vmem>>, vector<32x128xf32>,
    return
  }
  func.func @transform_0(%arg0: i32) -> (i32, i32) {
    %c0_i32 = arith.constant 0 : i32
    %c0_i32_0 = arith.constant 0 : i32
    return %arg0, %c0_i32 : i32, i32
  }
  func.func @transform_1(%arg0: i32) -> (i32, i32) {
    %c0_i32 = arith.constant 0 : i32
    %c0_i32_0 = arith.constant 0 : i32
    %c0_i32_1 = arith.constant 0 : i32
    return %c0_i32, %c0_i32_0 : i32, i32
  }
  func.func @transform_2(%arg0: i32) -> (i32, i32) {
    %c0_i32 = arith.constant 0 : i32
    %c0_i32_0 = arith.constant 0 : i32
    %c0_i32_1 = arith.constant 0 : i32
    return %c0_i32, %c0_i32_0 : i32, i32
  }
  func.func @transform_3(%arg0: i32) -> (i32, i32) {
    %c0_i32 = arith.constant 0 : i32
    %c0_i32_0 = arith.constant 0 : i32
    %c0_i32_1 = arith.constant 0 : i32
    return %c0_i32, %c0_i32_0 : i32, i32
  }
  func.func @transform_4(%arg0: i32) -> (i32, i32) {
    %c0_i32 = arith.constant 0 : i32
    %c0_i32_0 = arith.constant 0 : i32
    %c0_i32_1 = arith.constant 0 : i32
    return %c0_i32, %c0_i32_0 : i32, i32
  }
  func.func @transform_5(%arg0: i32) -> (i32, i32) {
    %c0_i32 = arith.constant 0 : i32
    %c0_i32_0 = arith.constant 0 : i32
    return %arg0, %c0_i32 : i32, i32
  }
}

</mosaic_0001>

<llo_original>
// kernel: basic_block_forward.1
$region0: #{basic_block_forward.1}
  #allocation0 [shape = 'u32[]', space=smem, size = 0x4, offset = 0x4, fixed_abs, tag = 'smem constant byte address 0x4 - core index']
  #allocation1 [shape = 'u32[144,128]{1,0:T(1,128)}', space=vmem, size = 0x12000, scoped, tag = 'internal scratch']
  %s0 = inlined_call_operand.vmem [shape: f32[64,128], index: 0, kind: input, shape index: {}]
  %s1 = inlined_call_operand.vmem [shape: bf16[384,128], index: 1, kind: input, shape index: {}]
  %s2 = inlined_call_operand.vmem [shape: bf16[384,128], index: 2, kind: input, shape index: {}]
  %s3 = inlined_call_operand.vmem [shape: f32[1,128], index: 3, kind: input, shape index: {}]
  %s4 = inlined_call_operand.vmem [shape: f32[1,128], index: 4, kind: input, shape index: {}]
  %s5 = inlined_call_operand.vmem [shape: f32[64,128], index: 5, kind: output, shape index: {}]
  %s6 = sld [smem:[#allocation0]]
  $region53: #{basic_block_forward.1} parent=0
    _
  %s8 = ssub.s32 1, %s6
  %s9 = scalar_select 0, %s8, %s6
  loop: start=0, step=1, limit=4
  $region2: #{basic_block_forward.1} parent=0 // loop_pre_header
    _
  $region3: #{basic_block_forward.1} parent=0 // loop_header
    %s11 = sphi 0, %s15
    %p12 = scmp.ge.s32.totalorder %s11, 4
    %s21 = sphi 0, %s23
    %s24 = sphi 0, %s21
    %s25 = sphi 0, %s24
    %s41 = sphi 0, %s25
    %s45 = sphi 0, %s45
    %s47 = sphi 0, %s45
    %s48 = sphi 0, %s47
    %s62 = sphi 0, %s48
    %s66 = sphi 0, %s66
    %s68 = sphi 0, %s66
    %s69 = sphi 0, %s68
    %s83 = sphi 0, %s69
    %s87 = sphi 0, %s87
    %s89 = sphi 0, %s87
    %s90 = sphi 0, %s89
    %s104 = sphi 0, %s90
    %s108 = sphi 0, %s108
    %s110 = sphi 0, %s108
    %s111 = sphi 0, %s110
    %s125 = sphi 0, %s111
    %s131 = sphi 0, %s133
    %s134 = sphi 0, %s131
    %s135 = sphi 0, %s134
    %s151 = sphi 0, %s135
  $region4: #{basic_block_forward.1} parent=0 // loop_header_branch
    %14 = sbr.rel (%p12) target = $region8
  $region5: #{basic_block_forward.1} parent=0 // loop_body
    %s16 = ssub.s32 %s11, 1
    %s17 = ssub.s32 %s11, 2
    %s18 = sadd.s32 %s11, 1
    %s19 = ssub.s32 %s11, %s18
    %p20 = scmp.eq.s32.totalorder %s19, 0
    %s22 = sadd.s32 %s21, 1
    %s23 = scalar_select %p20, %s21, %s22
    %p26 = pneg %p20
    %p27 = scmp.eq.s32.totalorder %s11, 1
    %p28 = por %p26, %p27
    %p29 = scmp.ne.s32.totalorder %s21, %s24
    %p30 = scmp.eq.s32.totalorder %s11, 0
    %p31 = por %p29, %p30
    %p32 = scmp.ne.s32.totalorder %s21, %s24
    %p33 = scmp.eq.s32.totalorder %s16, 1
    %p34 = por %p32, %p33
    %p35 = scmp.ne.s32.totalorder %s24, %s25
    %p36 = scmp.eq.s32.totalorder %s16, 0
    %p37 = por %p35, %p36
    %p38 = scmp.ne.s32.totalorder %s24, %s25
    %p39 = scmp.eq.s32.totalorder %s17, 1
    %p40 = por %p38, %p39
    %p42 = scmp.ne.s32.totalorder %s25, %s41
    %p43 = scmp.eq.s32.totalorder %s17, 0
    %p44 = por %p42, %p43
    %s46 = sadd.s32 %s45, 1
    %p49 = scmp.eq.s32.totalorder %s11, 1
    %p50 = scmp.ne.s32.totalorder %s45, %s47
    %p51 = scmp.eq.s32.totalorder %s11, 0
    %p52 = por %p50, %p51
    %p53 = scmp.ne.s32.totalorder %s45, %s47
    %p54 = scmp.eq.s32.totalorder %s16, 1
    %p55 = por %p53, %p54
    %p56 = scmp.ne.s32.totalorder %s47, %s48
    %p57 = scmp.eq.s32.totalorder %s16, 0
    %p58 = por %p56, %p57
    %p59 = scmp.ne.s32.totalorder %s47, %s48
    %p60 = scmp.eq.s32.totalorder %s17, 1
    %p61 = por %p59, %p60
    %p63 = scmp.ne.s32.totalorder %s48, %s62
    %p64 = scmp.eq.s32.totalorder %s17, 0
    %p65 = por %p63, %p64
    %s67 = sadd.s32 %s66, 1
    %p70 = scmp.eq.s32.totalorder %s11, 1
    %p71 = scmp.ne.s32.totalorder %s66, %s68
    %p72 = scmp.eq.s32.totalorder %s11, 0
    %p73 = por %p71, %p72
    %p74 = scmp.ne.s32.totalorder %s66, %s68
    %p75 = scmp.eq.s32.totalorder %s16, 1
    %p76 = por %p74, %p75
    %p77 = scmp.ne.s32.totalorder %s68, %s69
    %p78 = scmp.eq.s32.totalorder %s16, 0
    %p79 = por %p77, %p78
    %p80 = scmp.ne.s32.totalorder %s68, %s69
    %p81 = scmp.eq.s32.totalorder %s17, 1
    %p82 = por %p80, %p81
    %p84 = scmp.ne.s32.totalorder %s69, %s83
    %p85 = scmp.eq.s32.totalorder %s17, 0
    %p86 = por %p84, %p85
    %s88 = sadd.s32 %s87, 1
    %p91 = scmp.eq.s32.totalorder %s11, 1
    %p92 = scmp.ne.s32.totalorder %s87, %s89
    %p93 = scmp.eq.s32.totalorder %s11, 0
    %p94 = por %p92, %p93
    %p95 = scmp.ne.s32.totalorder %s87, %s89
    %p96 = scmp.eq.s32.totalorder %s16, 1
    %p97 = por %p95, %p96
    %p98 = scmp.ne.s32.totalorder %s89, %s90
    %p99 = scmp.eq.s32.totalorder %s16, 0
    %p100 = por %p98, %p99
    %p101 = scmp.ne.s32.totalorder %s89, %s90
    %p102 = scmp.eq.s32.totalorder %s17, 1
    %p103 = por %p101, %p102
    %p105 = scmp.ne.s32.totalorder %s90, %s104
    %p106 = scmp.eq.s32.totalorder %s17, 0
    %p107 = por %p105, %p106
    %s109 = sadd.s32 %s108, 1
    %p112 = scmp.eq.s32.totalorder %s11, 1
    %p113 = scmp.ne.s32.totalorder %s108, %s110
    %p114 = scmp.eq.s32.totalorder %s11, 0
    %p115 = por %p113, %p114
    %p116 = scmp.ne.s32.totalorder %s108, %s110
    %p117 = scmp.eq.s32.totalorder %s16, 1
    %p118 = por %p116, %p117
    %p119 = scmp.ne.s32.totalorder %s110, %s111
    %p120 = scmp.eq.s32.totalorder %s16, 0
    %p121 = por %p119, %p120
    %p122 = scmp.ne.s32.totalorder %s110, %s111
    %p123 = scmp.eq.s32.totalorder %s17, 1
    %p124 = por %p122, %p123
    %p126 = scmp.ne.s32.totalorder %s111, %s125
    %p127 = scmp.eq.s32.totalorder %s17, 0
    %p128 = por %p126, %p127
    %s129 = ssub.s32 %s11, %s18
    %p130 = scmp.eq.s32.totalorder %s129, 0
    %s132 = sadd.s32 %s131, 1
    %s133 = scalar_select %p130, %s131, %s132
    %p136 = pneg %p130
    %p137 = scmp.eq.s32.totalorder %s11, 1
    %p138 = por %p136, %p137
    %p139 = scmp.ne.s32.totalorder %s131, %s134
    %p140 = scmp.eq.s32.totalorder %s11, 0
    %p141 = por %p139, %p140
    %p142 = scmp.ne.s32.totalorder %s131, %s134
    %p143 = scmp.eq.s32.totalorder %s16, 1
    %p144 = por %p142, %p143
    %p145 = scmp.ne.s32.totalorder %s134, %s135
    %p146 = scmp.eq.s32.totalorder %s16, 0
    %p147 = por %p145, %p146
    %p148 = scmp.ne.s32.totalorder %s134, %s135
    %p149 = scmp.eq.s32.totalorder %s17, 1
    %p150 = por %p148, %p149
    %p152 = scmp.ne.s32.totalorder %s135, %s151
    %p153 = scmp.eq.s32.totalorder %s17, 0
    %p154 = por %p152, %p153
    %p155 = scmp.le.s32.totalorder 1, %s11
    %p156 = scmp.lt.s32.totalorder %s11, 3
    %p157 = pnand %p155, %p156
    %p158 = pneg %p157
    // Predicated region
    $region9: #{basic_block_forward.1} parent=5 // pred_check
      _
    $region10: #{basic_block_forward.1} parent=5 // pred_check_branch
      %160 = sbr.rel (%p157) target = $region12
    $region11: #{basic_block_forward.1} parent=5 // pred_region
      %s161 = ssub.s32 %s11, 1
      // Predicated region
      $region13: #{basic_block_forward.1} parent=11 // pred_check
        %p162 = pneg %p58
      $region14: #{basic_block_forward.1} parent=11 // pred_check_branch
        %164 = sbr.rel (%p162) target = $region16
      $region15: #{basic_block_forward.1} parent=11 // pred_region
        _
      $region16: #{basic_block_forward.1} parent=11 // pred_fallthru
        _
      // Predicated region
      $region17: #{basic_block_forward.1} parent=11 // pred_check
        %p165 = pneg %p79
      $region18: #{basic_block_forward.1} parent=11 // pred_check_branch
        %167 = sbr.rel (%p165) target = $region20
      $region19: #{basic_block_forward.1} parent=11 // pred_region
        _
      $region20: #{basic_block_forward.1} parent=11 // pred_fallthru
        _
      // Predicated region
      $region21: #{basic_block_forward.1} parent=11 // pred_check
        %p168 = pneg %p100
      $region22: #{basic_block_forward.1} parent=11 // pred_check_branch
        %170 = sbr.rel (%p168) target = $region24
      $region23: #{basic_block_forward.1} parent=11 // pred_region
        _
      $region24: #{basic_block_forward.1} parent=11 // pred_fallthru
        _
      // Predicated region
      $region25: #{basic_block_forward.1} parent=11 // pred_check
        %p171 = pneg %p121
      $region26: #{basic_block_forward.1} parent=11 // pred_check_branch
        %173 = sbr.rel (%p171) target = $region28
      $region27: #{basic_block_forward.1} parent=11 // pred_region
        _
      $region28: #{basic_block_forward.1} parent=11 // pred_fallthru
        _
    $region12: #{basic_block_forward.1} parent=5 // pred_fallthru
      _
    %p174 = scmp.lt.s32.totalorder %s11, 2
    // Predicated region
    $region29: #{basic_block_forward.1} parent=5 // pred_check
      %p175 = pneg %p174
    $region30: #{basic_block_forward.1} parent=5 // pred_check_branch
      %177 = sbr.rel (%p175) target = $region32
    $region31: #{basic_block_forward.1} parent=5 // pred_region
      // Predicated region
      $region33: #{basic_block_forward.1} parent=31 // pred_check
        %p178 = pneg %p31
      $region34: #{basic_block_forward.1} parent=31 // pred_check_branch
        %180 = sbr.rel (%p178) target = $region36
      $region35: #{basic_block_forward.1} parent=31 // pred_region
        %s181 = smul.u32 4, %s11
        %p182 = scmp.lt.s32.totalorder %s181, 7
        %s183 = scalar_select %p182, %s181, 7
        %s184 = smul.addr %s183, 8
        %s185 = scalar_lea.vmem %s0, %s184
        %s186 = smul.u32 4, %s11
      $region36: #{basic_block_forward.1} parent=31 // pred_fallthru
        _
    $region32: #{basic_block_forward.1} parent=5 // pred_fallthru
      _
    %p187 = scmp.le.s32.totalorder 1, %s11
    %p188 = scmp.lt.s32.totalorder %s11, 3
    %p189 = pnand %p187, %p188
    %p190 = pneg %p189
    // Predicated region
    $region37: #{basic_block_forward.1} parent=5 // pred_check
      _
    $region38: #{basic_block_forward.1} parent=5 // pred_check_branch
      %192 = sbr.rel (%p189) target = $region40
    $region39: #{basic_block_forward.1} parent=5 // pred_region
      %s193 = ssub.s32 %s11, 1
      %s194 = smul.u32 4, %s16
      %p195 = scmp.lt.s32.totalorder %s194, 7
      %s196 = scalar_select %p195, %s194, 7
      %s197 = smul.addr %s196, 8
      %s198 = scalar_lea.vmem %s0, %s197
      %p199 = pneg %p37
      %p200 = pneg %p34
      %p201 = pneg %p58
      %p202 = pneg %p55
      %p203 = pneg %p79
      %p204 = pneg %p76
      %p205 = pneg %p100
      %p206 = pneg %p97
      %p207 = pneg %p121
      %p208 = pneg %p118
      %p209 = pneg %p147
      %p210 = pneg %p144
      %s211 = smul.u32 4, %s16
      %p212 = scmp.lt.s32.totalorder %s211, 7
      %s213 = scalar_select %p212, %s211, 7
      %s214 = smul.addr %s213, 8
      %s215 = scalar_lea.vmem %s5, %s214
      %s216 = smul.u32 4, %s16
      %p217 = scmp.lt.s32.totalorder %s216, 7
      %s218 = scalar_select %p217, %s216, 7
      %s219 = smul.addr %s218, 8
      %s220 = scalar_lea.vmem %s0, %s219
      %s221 = smul.u32 4, %s16
      %s222 = smul.u32 4, %s16
      %p223 = scmp.lt.s32.totalorder %s222, 7
      %s224 = scalar_select %p223, %s222, 7
      %s225 = smul.addr %s224, 8
      %s226 = scalar_lea.vmem %s5, %s225
      %s227 = smul.u32 4, %s16
      %v229 = vld [vmem:[%s220] sm:$0xff]
      %v230 = vld [vmem:[%s220 + $0x8] sm:$0xff]
      %v231 = vld [vmem:[%s220 + $0x10] sm:$0xff]
      %v232 = vld [vmem:[%s220 + $0x18] sm:$0xff]
      %v233 = vlaneseq
      %v234 = vshrl.u32 %v233, 7
      %v235 = vadd.s32 %v234, 8
      %v236 = vadd.s32 %v234, 16
      %v237 = vadd.s32 %v234, 24
      %vm238 = vcmp.lt.s32.totalorder %v234, 0
      %v239 = vsub.s32 0, %v234
      %v240 = vsel %vm238, %v239, %v234
      %v241 = vshrl.u32 %v240, 4
      %v242 = vand.u32 %v240, 15
      %v243 = vsub.s32 0, %v242
      %v244 = vsel %vm238, %v243, %v242
      %vm245 = vcmp.lt.s32.totalorder %v235, 0
      %v246 = vsub.s32 0, %v235
      %v247 = vsel %vm245, %v246, %v235
      %v248 = vshrl.u32 %v247, 4
      %v249 = vand.u32 %v247, 15
      %v250 = vsub.s32 0, %v249
      %v251 = vsel %vm245, %v250, %v249
      %vm252 = vcmp.lt.s32.totalorder %v236, 0
      %v253 = vsub.s32 0, %v236
      %v254 = vsel %vm252, %v253, %v236
      %v255 = vshrl.u32 %v254, 4
      %v256 = vand.u32 %v254, 15
      %v257 = vsub.s32 0, %v256
      %v258 = vsel %vm252, %v257, %v256
      %vm259 = vcmp.lt.s32.totalorder %v237, 0
      %v260 = vsub.s32 0, %v237
      %v261 = vsel %vm259, %v260, %v237
      %v262 = vshrl.u32 %v261, 4
      %v263 = vand.u32 %v261, 15
      %v264 = vsub.s32 0, %v263
      %v265 = vsel %vm259, %v264, %v263
      %vm266 = vcmp.ne.s32.totalorder %v244, 0
      %vm267 = vcmp.ne.s32.totalorder %v251, 0
      %vm268 = vcmp.ne.s32.totalorder %v258, 0
      %vm269 = vcmp.ne.s32.totalorder %v265, 0
      %vm270 = vcmp.lt.s32.totalorder %v244, 0
      %vm271 = vcmp.lt.s32.totalorder %v251, 0
      %vm272 = vcmp.lt.s32.totalorder %v258, 0
      %vm273 = vcmp.lt.s32.totalorder %v265, 0
      %vm274 = vmand %vm270, %vm266
      %vm275 = vmand %vm271, %vm267
      %vm276 = vmand %vm272, %vm268
      %vm277 = vmand %vm273, %vm269
      %v278 = vadd.s32 %v244, 16
      %v279 = vadd.s32 %v251, 16
      %v280 = vadd.s32 %v258, 16
      %v281 = vadd.s32 %v265, 16
      %v282 = vsel %vm274, %v278, %v244
      %v283 = vsel %vm275, %v279, %v251
      %v284 = vsel %vm276, %v280, %v258
      %v285 = vsel %vm277, %v281, %v265
      %vm286 = vcmp.eq.s32.totalorder %v282, 0
      %vm287 = vcmp.eq.s32.totalorder %v283, 0
      %vm288 = vcmp.eq.s32.totalorder %v284, 0
      %vm289 = vcmp.eq.s32.totalorder %v285, 0
      %vm290 = vcmp.eq.s32.totalorder %v282, 15
      %vm291 = vcmp.eq.s32.totalorder %v283, 15
      %vm292 = vcmp.eq.s32.totalorder %v284, 15
      %vm293 = vcmp.eq.s32.totalorder %v285, 15
      %v294 = vrot.slane %v229, 7
      %v295 = vrot.slane %v230, 7
      %v296 = vrot.slane %v231, 7
      %v297 = vrot.slane %v232, 7
      %vm298 = vcmp.lt.s32.totalorder %v234, 1
      %v299 = vsel %vm298, %v296, %v297
      %v300 = vsel %vm298, %v295, %v296
      %v301 = vsel %vm298, %v294, %v295
      %v302 = vsel %vm298, %v297, %v294
      %v303 = vsel %vm286, 0.0, %v302
      %v304 = vsel %vm287, 0.0, %v301
      %v305 = vsel %vm288, 0.0, %v300
      %v306 = vsel %vm289, 0.0, %v299
      %v307 = vrot.slane %v229, 1
      %v308 = vrot.slane %v230, 1
      %v309 = vrot.slane %v231, 1
      %v310 = vrot.slane %v232, 1
      %vm311 = vcmp.lt.s32.totalorder %v234, 7
      %v312 = vsel %vm311, %v309, %v310
      %v313 = vsel %vm311, %v308, %v309
      %v314 = vsel %vm311, %v307, %v308
      %v315 = vsel %vm311, %v310, %v307
      %v316 = vsel %vm290, 0.0, %v314
      %v317 = vsel %vm291, 0.0, %v313
      %v318 = vsel %vm292, 0.0, %v312
      %v319 = vsel %vm293, 0.0, %v315
      %v320 = vpack.c.bf16 %v304, %v303
      %v321 = vpack.c.bf16 %v230, %v229
      %v322 = vpack.c.bf16 %v317, %v316
      %v323 = vpack.c.bf16 %v306, %v305
      %v324 = vpack.c.bf16 %v232, %v231
      %v325 = vpack.c.bf16 %v319, %v318
      %v326 = vld [vmem:[%s1] sm:$0xf]
      %v327 = vld [vmem:[%s1 + $0x4] sm:$0xf]
      %v328 = vld [vmem:[%s1 + $0x8] sm:$0xf]
      %v329 = vld [vmem:[%s1 + $0xc] sm:$0xf]
      %v330 = vld [vmem:[%s1 + $0x10] sm:$0xf]
      %v331 = vld [vmem:[%s1 + $0x14] sm:$0xf]
      %v332 = vld [vmem:[%s1 + $0x18] sm:$0xf]
      %v333 = vld [vmem:[%s1 + $0x1c] sm:$0xf]
      %v334 = vld [vmem:[%s1 + $0x20] sm:$0xf]
      %v335 = vld [vmem:[%s1 + $0x24] sm:$0xf]
      %v336 = vld [vmem:[%s1 + $0x28] sm:$0xf]
      %v337 = vld [vmem:[%s1 + $0x2c] sm:$0xf]
      %v338 = vld [vmem:[%s1 + $0x30] sm:$0xf]
      %v339 = vld [vmem:[%s1 + $0x34] sm:$0xf]
      %v340 = vld [vmem:[%s1 + $0x38] sm:$0xf]
      %v341 = vld [vmem:[%s1 + $0x3c] sm:$0xf]
      %v342 = vld [vmem:[%s1 + $0x40] sm:$0xf]
      %v343 = vld [vmem:[%s1 + $0x44] sm:$0xf]
      %v344 = vld [vmem:[%s1 + $0x48] sm:$0xf]
      %v345 = vld [vmem:[%s1 + $0x4c] sm:$0xf]
      %v346 = vld [vmem:[%s1 + $0x50] sm:$0xf]
      %v347 = vld [vmem:[%s1 + $0x54] sm:$0xf]
      %v348 = vld [vmem:[%s1 + $0x58] sm:$0xf]
      %v349 = vld [vmem:[%s1 + $0x5c] sm:$0xf]
      %v350 = vld [vmem:[%s1 + $0x60] sm:$0xf]
      %v351 = vld [vmem:[%s1 + $0x64] sm:$0xf]
      %v352 = vld [vmem:[%s1 + $0x68] sm:$0xf]
      %v353 = vld [vmem:[%s1 + $0x6c] sm:$0xf]
      %v354 = vld [vmem:[%s1 + $0x70] sm:$0xf]
      %v355 = vld [vmem:[%s1 + $0x74] sm:$0xf]
      %v356 = vld [vmem:[%s1 + $0x78] sm:$0xf]
      %v357 = vld [vmem:[%s1 + $0x7c] sm:$0xf]
      %v358 = vld [vmem:[%s1 + $0x80] sm:$0xf]
      %v359 = vld [vmem:[%s1 + $0x84] sm:$0xf]
      %v360 = vld [vmem:[%s1 + $0x88] sm:$0xf]
      %v361 = vld [vmem:[%s1 + $0x8c] sm:$0xf]
      %v362 = vld [vmem:[%s1 + $0x90] sm:$0xf]
      %v363 = vld [vmem:[%s1 + $0x94] sm:$0xf]
      %v364 = vld [vmem:[%s1 + $0x98] sm:$0xf]
      %v365 = vld [vmem:[%s1 + $0x9c] sm:$0xf]
      %v366 = vld [vmem:[%s1 + $0xa0] sm:$0xf]
      %v367 = vld [vmem:[%s1 + $0xa4] sm:$0xf]
      %v368 = vld [vmem:[%s1 + $0xa8] sm:$0xf]
      %v369 = vld [vmem:[%s1 + $0xac] sm:$0xf]
      %v370 = vld [vmem:[%s1 + $0xb0] sm:$0xf]
      %v371 = vld [vmem:[%s1 + $0xb4] sm:$0xf]
      %v372 = vld [vmem:[%s1 + $0xb8] sm:$0xf]
      %v373 = vld [vmem:[%s1 + $0xbc] sm:$0xf]
      %v374 = vld [vmem:[%s3] sm:$0x1]
      %v376 = vlaneseq
      %v377 = vshrl.u32 %v376, 7
      %v378 = vsub.s32 0, %v377
      %v379 = vrot.slane %v374, %v378
      %v429 = vunpack.c.l.b16 %v326
      %v430 = vunpack.c.l.b16 %v327
      %v431 = vunpack.c.l.b16 %v328
      %v432 = vunpack.c.l.b16 %v329
      %v433 = vunpack.c.l.b16 %v330
      %v434 = vunpack.c.l.b16 %v331
      %v435 = vunpack.c.l.b16 %v332
      %v436 = vunpack.c.l.b16 %v333
      %v437 = vunpack.c.l.b16 %v334
      %v438 = vunpack.c.l.b16 %v335
      %v439 = vunpack.c.l.b16 %v336
      %v440 = vunpack.c.l.b16 %v337
      %v441 = vunpack.c.l.b16 %v338
      %v442 = vunpack.c.l.b16 %v339
      %v443 = vunpack.c.l.b16 %v340
      %v444 = vunpack.c.l.b16 %v341
      %v445 = vunpack.c.l.b16 %v342
      %v446 = vunpack.c.l.b16 %v343
      %v447 = vunpack.c.l.b16 %v344
      %v448 = vunpack.c.l.b16 %v345
      %v449 = vunpack.c.l.b16 %v346
      %v450 = vunpack.c.l.b16 %v347
      %v451 = vunpack.c.l.b16 %v348
      %v452 = vunpack.c.l.b16 %v349
      %v453 = vunpack.c.l.b16 %v350
      %v454 = vunpack.c.l.b16 %v351
      %v455 = vunpack.c.l.b16 %v352
      %v456 = vunpack.c.l.b16 %v353
      %v457 = vunpack.c.l.b16 %v354
      %v458 = vunpack.c.l.b16 %v355
      %v459 = vunpack.c.l.b16 %v356
      %v460 = vunpack.c.l.b16 %v357
      %v461 = vunpack.c.l.b16 %v358
      %v462 = vunpack.c.l.b16 %v359
      %v463 = vunpack.c.l.b16 %v360
      %v464 = vunpack.c.l.b16 %v361
      %v465 = vunpack.c.l.b16 %v362
      %v466 = vunpack.c.l.b16 %v363
      %v467 = vunpack.c.l.b16 %v364
      %v468 = vunpack.c.l.b16 %v365
      %v469 = vunpack.c.l.b16 %v366
      %v470 = vunpack.c.l.b16 %v367
      %v471 = vunpack.c.l.b16 %v368
      %v472 = vunpack.c.l.b16 %v369
      %v473 = vunpack.c.l.b16 %v370
      %v474 = vunpack.c.l.b16 %v371
      %v475 = vunpack.c.l.b16 %v372
      %v476 = vunpack.c.l.b16 %v373
      %v477 = vpack.c.b16 %v430, %v429
      %v478 = vpack.c.b16 %v432, %v431
      %v479 = vpack.c.b16 %v434, %v433
      %v480 = vpack.c.b16 %v436, %v435
      %v481 = vpack.c.b16 %v438, %v437
      %v482 = vpack.c.b16 %v440, %v439
      %v483 = vpack.c.b16 %v442, %v441
      %v484 = vpack.c.b16 %v444, %v443
      %v485 = vpack.c.b16 %v446, %v445
      %v486 = vpack.c.b16 %v448, %v447
      %v487 = vpack.c.b16 %v450, %v449
      %v488 = vpack.c.b16 %v452, %v451
      %v489 = vpack.c.b16 %v454, %v453
      %v490 = vpack.c.b16 %v456, %v455
      %v491 = vpack.c.b16 %v458, %v457
      %v492 = vpack.c.b16 %v460, %v459
      %v493 = vpack.c.b16 %v462, %v461
      %v494 = vpack.c.b16 %v464, %v463
      %v495 = vpack.c.b16 %v466, %v465
      %v496 = vpack.c.b16 %v468, %v467
      %v497 = vpack.c.b16 %v470, %v469
      %v498 = vpack.c.b16 %v472, %v471
      %v499 = vpack.c.b16 %v474, %v473
      %v500 = vpack.c.b16 %v476, %v475
      %525 = vmatprep.subr.bf16.mxu0 0
      %526 = vmatpush1.bf16.msra.mxu0 %v477
      %527 = vmatprep.subr.bf16.mxu0 0
      %528 = vmatpush1.bf16.msra.mxu0 %v478
      %529 = vmatprep.subr.bf16.mxu0 0
      %530 = vmatpush1.bf16.msra.mxu0 %v479
      %531 = vmatprep.subr.bf16.mxu0 0
      %532 = vmatpush1.bf16.msra.mxu0 %v480
      %533 = vmatprep.subr.bf16.mxu0 0
      %534 = vmatpush1.bf16.msra.mxu0 %v481
      %535 = vmatprep.subr.bf16.mxu0 0
      %536 = vmatpush1.bf16.msra.mxu0 %v482
      %537 = vmatprep.subr.bf16.mxu0 0
      %538 = vmatpush1.bf16.msra.mxu0 %v483
      %539 = vmatprep.subr.bf16.mxu0 0
      %540 = vmatpush1.bf16.msra.mxu0 %v484
      %541 = vmatprep.subr.bf16.mxu0 0
      %542 = vmatpush1.bf16.msra.mxu0 %v485
      %543 = vmatprep.subr.bf16.mxu0 0
      %544 = vmatpush1.bf16.msra.mxu0 %v486
      %545 = vmatprep.subr.bf16.mxu0 0
      %546 = vmatpush1.bf16.msra.mxu0 %v487
      %547 = vmatprep.subr.bf16.mxu0 0
      %548 = vmatpush1.bf16.msra.mxu0 %v488
      %549 = vmatprep.subr.bf16.mxu0 0
      %550 = vmatpush1.bf16.msra.mxu0 %v489
      %551 = vmatprep.subr.bf16.mxu0 0
      %552 = vmatpush1.bf16.msra.mxu0 %v490
      %553 = vmatprep.subr.bf16.mxu0 0
      %554 = vmatpush1.bf16.msra.mxu0 %v491
      %555 = vmatprep.subr.bf16.mxu0 0
      %556 = vmatpush1.bf16.msra.mxu0 %v492
      %557 = vmatprep.mubr.bf16.mxu0 %v321
      %558 = vmatmul.mubr.bf16.gmra.mrb[0].mxu0 %v320
      %v559 = vpop.f32.mrb[0].mxu0
      %v560 = vadd.f32 %v379, %v559
      %v561 = vpop.f32.mrb[0].mxu0
      %v562 = vpop.f32.mrb[0].mxu0
      %v563 = vadd.f32 %v379, %v562
      %v564 = vpop.f32.mrb[0].mxu0
      %565 = vmatprep.mubr.bf16.mxu0 %v324
      %566 = vmatmul.mubr.bf16.gmra.mrb[0].mxu0 %v323
      %v567 = vpop.f32.mrb[0].mxu0
      %v568 = vadd.f32 %v379, %v567
      %v569 = vpop.f32.mrb[0].mxu0
      %v570 = vpop.f32.mrb[0].mxu0
      %v571 = vadd.f32 %v379, %v570
      %v572 = vpop.f32.mrb[0].mxu0
      %573 = vdwg.mxu0
      %574 = vmatprep.subr.bf16.mxu0 0
      %575 = vmatpush1.bf16.msra.mxu0 %v493
      %576 = vmatprep.subr.bf16.mxu0 0
      %577 = vmatpush1.bf16.msra.mxu0 %v494
      %578 = vmatprep.subr.bf16.mxu0 0
      %579 = vmatpush1.bf16.msra.mxu0 %v495
      %580 = vmatprep.subr.bf16.mxu0 0
      %581 = vmatpush1.bf16.msra.mxu0 %v496
      %582 = vmatprep.subr.bf16.mxu0 0
      %583 = vmatpush1.bf16.msra.mxu0 %v497
      %584 = vmatprep.subr.bf16.mxu0 0
      %585 = vmatpush1.bf16.msra.mxu0 %v498
      %586 = vmatprep.subr.bf16.mxu0 0
      %587 = vmatpush1.bf16.msra.mxu0 %v499
      %588 = vmatprep.subr.bf16.mxu0 0
      %589 = vmatpush1.bf16.msra.mxu0 %v500
      %590 = vmatprep.subr.bf16.mxu0 0
      %591 = vmatpush1.bf16.msra.mxu0 0
      %592 = vmatprep.subr.bf16.mxu0 0
      %593 = vmatpush1.bf16.msra.mxu0 0
      %594 = vmatprep.subr.bf16.mxu0 0
      %595 = vmatpush1.bf16.msra.mxu0 0
      %596 = vmatprep.subr.bf16.mxu0 0
      %597 = vmatpush1.bf16.msra.mxu0 0
      %598 = vmatprep.subr.bf16.mxu0 0
      %599 = vmatpush1.bf16.msra.mxu0 0
      %600 = vmatprep.subr.bf16.mxu0 0
      %601 = vmatpush1.bf16.msra.mxu0 0
      %602 = vmatprep.subr.bf16.mxu0 0
      %603 = vmatpush1.bf16.msra.mxu0 0
      %604 = vmatprep.subr.bf16.mxu0 0
      %605 = vmatpush1.bf16.msra.mxu0 0
      %606 = vmatprep.mubr.bf16.mxu0 0
      %607 = vmatmul.mubr.bf16.gmra.mrb[0].mxu0 %v322
      %v608 = vpop.f32.mrb[0].mxu0
      %v609 = vadd.f32 %v560, %v608
      %v610 = vpop.f32.mrb[0].mxu0
      %v611 = vpop.f32.mrb[0].mxu0
      %v612 = vadd.f32 %v563, %v611
      %v613 = vpop.f32.mrb[0].mxu0
      %614 = vmatprep.mubr.bf16.mxu0 0
      %615 = vmatmul.mubr.bf16.gmra.mrb[0].mxu0 %v325
      %v616 = vpop.f32.mrb[0].mxu0
      %v617 = vadd.f32 %v568, %v616
      %v618 = vpop.f32.mrb[0].mxu0
      %v619 = vpop.f32.mrb[0].mxu0
      %v620 = vadd.f32 %v571, %v619
      %v621 = vpop.f32.mrb[0].mxu0
      %622 = vdwg.mxu0
      %v623 = vmax.f32 %v609, 0.0
      %v624 = vmax.f32 %v612, 0.0
      %v625 = vmax.f32 %v617, 0.0
      %v626 = vmax.f32 %v620, 0.0
      %v627 = vrot.slane %v623, 7
      %v628 = vrot.slane %v624, 7
      %v629 = vrot.slane %v625, 7
      %v630 = vrot.slane %v626, 7
      %v631 = vsel %vm298, %v629, %v630
      %v632 = vsel %vm298, %v628, %v629
      %v633 = vsel %vm298, %v627, %v628
      %v634 = vsel %vm298, %v630, %v627
      %v635 = vsel %vm286, 0.0, %v634
      %v636 = vsel %vm287, 0.0, %v633
      %v637 = vsel %vm288, 0.0, %v632
      %v638 = vsel %vm289, 0.0, %v631
      %v639 = vrot.slane %v623, 1
      %v640 = vrot.slane %v624, 1
      %v641 = vrot.slane %v625, 1
      %v642 = vrot.slane %v626, 1
      %v643 = vsel %vm311, %v641, %v642
      %v644 = vsel %vm311, %v640, %v641
      %v645 = vsel %vm311, %v639, %v640
      %v646 = vsel %vm311, %v642, %v639
      %v647 = vsel %vm290, 0.0, %v645
      %v648 = vsel %vm291, 0.0, %v644
      %v649 = vsel %vm292, 0.0, %v643
      %v650 = vsel %vm293, 0.0, %v646
      %v651 = vpack.c.bf16 %v636, %v635
      %v652 = vpack.c.bf16 %v624, %v623
      %v653 = vpack.c.bf16 %v648, %v647
      %v654 = vpack.c.bf16 %v638, %v637
      %v655 = vpack.c.bf16 %v626, %v625
      %v656 = vpack.c.bf16 %v650, %v649
      %v657 = vld [vmem:[%s2] sm:$0xf]
      %v658 = vld [vmem:[%s2 + $0x4] sm:$0xf]
      %v659 = vld [vmem:[%s2 + $0x8] sm:$0xf]
      %v660 = vld [vmem:[%s2 + $0xc] sm:$0xf]
      %v661 = vld [vmem:[%s2 + $0x10] sm:$0xf]
      %v662 = vld [vmem:[%s2 + $0x14] sm:$0xf]
      %v663 = vld [vmem:[%s2 + $0x18] sm:$0xf]
      %v664 = vld [vmem:[%s2 + $0x1c] sm:$0xf]
      %v665 = vld [vmem:[%s2 + $0x20] sm:$0xf]
      %v666 = vld [vmem:[%s2 + $0x24] sm:$0xf]
      %v667 = vld [vmem:[%s2 + $0x28] sm:$0xf]
      %v668 = vld [vmem:[%s2 + $0x2c] sm:$0xf]
      %v669 = vld [vmem:[%s2 + $0x30] sm:$0xf]
      %v670 = vld [vmem:[%s2 + $0x34] sm:$0xf]
      %v671 = vld [vmem:[%s2 + $0x38] sm:$0xf]
      %v672 = vld [vmem:[%s2 + $0x3c] sm:$0xf]
      %v673 = vld [vmem:[%s2 + $0x40] sm:$0xf]
      %v674 = vld [vmem:[%s2 + $0x44] sm:$0xf]
      %v675 = vld [vmem:[%s2 + $0x48] sm:$0xf]
      %v676 = vld [vmem:[%s2 + $0x4c] sm:$0xf]
      %v677 = vld [vmem:[%s2 + $0x50] sm:$0xf]
      %v678 = vld [vmem:[%s2 + $0x54] sm:$0xf]
      %v679 = vld [vmem:[%s2 + $0x58] sm:$0xf]
      %v680 = vld [vmem:[%s2 + $0x5c] sm:$0xf]
      %v681 = vld [vmem:[%s2 + $0x60] sm:$0xf]
      %v682 = vld [vmem:[%s2 + $0x64] sm:$0xf]
      %v683 = vld [vmem:[%s2 + $0x68] sm:$0xf]
      %v684 = vld [vmem:[%s2 + $0x6c] sm:$0xf]
      %v685 = vld [vmem:[%s2 + $0x70] sm:$0xf]
      %v686 = vld [vmem:[%s2 + $0x74] sm:$0xf]
      %v687 = vld [vmem:[%s2 + $0x78] sm:$0xf]
      %v688 = vld [vmem:[%s2 + $0x7c] sm:$0xf]
      %v689 = vld [vmem:[%s2 + $0x80] sm:$0xf]
      %v690 = vld [vmem:[%s2 + $0x84] sm:$0xf]
      %v691 = vld [vmem:[%s2 + $0x88] sm:$0xf]
      %v692 = vld [vmem:[%s2 + $0x8c] sm:$0xf]
      %v693 = vld [vmem:[%s2 + $0x90] sm:$0xf]
      %v694 = vld [vmem:[%s2 + $0x94] sm:$0xf]
      %v695 = vld [vmem:[%s2 + $0x98] sm:$0xf]
      %v696 = vld [vmem:[%s2 + $0x9c] sm:$0xf]
      %v697 = vld [vmem:[%s2 + $0xa0] sm:$0xf]
      %v698 = vld [vmem:[%s2 + $0xa4] sm:$0xf]
      %v699 = vld [vmem:[%s2 + $0xa8] sm:$0xf]
      %v700 = vld [vmem:[%s2 + $0xac] sm:$0xf]
      %v701 = vld [vmem:[%s2 + $0xb0] sm:$0xf]
      %v702 = vld [vmem:[%s2 + $0xb4] sm:$0xf]
      %v703 = vld [vmem:[%s2 + $0xb8] sm:$0xf]
      %v704 = vld [vmem:[%s2 + $0xbc] sm:$0xf]
      %v705 = vld [vmem:[%s4] sm:$0x1]
      %v707 = vlaneseq
      %v708 = vshrl.u32 %v707, 7
      %v709 = vsub.s32 0, %v708
      %v710 = vrot.slane %v705, %v709
      %v760 = vunpack.c.l.b16 %v657
      %v761 = vunpack.c.l.b16 %v658
      %v762 = vunpack.c.l.b16 %v659
      %v763 = vunpack.c.l.b16 %v660
      %v764 = vunpack.c.l.b16 %v661
      %v765 = vunpack.c.l.b16 %v662
      %v766 = vunpack.c.l.b16 %v663
      %v767 = vunpack.c.l.b16 %v664
      %v768 = vunpack.c.l.b16 %v665
      %v769 = vunpack.c.l.b16 %v666
      %v770 = vunpack.c.l.b16 %v667
      %v771 = vunpack.c.l.b16 %v668
      %v772 = vunpack.c.l.b16 %v669
      %v773 = vunpack.c.l.b16 %v670
      %v774 = vunpack.c.l.b16 %v671
      %v775 = vunpack.c.l.b16 %v672
      %v776 = vunpack.c.l.b16 %v673
      %v777 = vunpack.c.l.b16 %v674
      %v778 = vunpack.c.l.b16 %v675
      %v779 = vunpack.c.l.b16 %v676
      %v780 = vunpack.c.l.b16 %v677
      %v781 = vunpack.c.l.b16 %v678
      %v782 = vunpack.c.l.b16 %v679
      %v783 = vunpack.c.l.b16 %v680
      %v784 = vunpack.c.l.b16 %v681
      %v785 = vunpack.c.l.b16 %v682
      %v786 = vunpack.c.l.b16 %v683
      %v787 = vunpack.c.l.b16 %v684
      %v788 = vunpack.c.l.b16 %v685
      %v789 = vunpack.c.l.b16 %v686
      %v790 = vunpack.c.l.b16 %v687
      %v791 = vunpack.c.l.b16 %v688
      %v792 = vunpack.c.l.b16 %v689
      %v793 = vunpack.c.l.b16 %v690
      %v794 = vunpack.c.l.b16 %v691
      %v795 = vunpack.c.l.b16 %v692
      %v796 = vunpack.c.l.b16 %v693
      %v797 = vunpack.c.l.b16 %v694
      %v798 = vunpack.c.l.b16 %v695
      %v799 = vunpack.c.l.b16 %v696
      %v800 = vunpack.c.l.b16 %v697
      %v801 = vunpack.c.l.b16 %v698
      %v802 = vunpack.c.l.b16 %v699
      %v803 = vunpack.c.l.b16 %v700
      %v804 = vunpack.c.l.b16 %v701
      %v805 = vunpack.c.l.b16 %v702
      %v806 = vunpack.c.l.b16 %v703
      %v807 = vunpack.c.l.b16 %v704
      %v808 = vpack.c.b16 %v761, %v760
      %v809 = vpack.c.b16 %v763, %v762
      %v810 = vpack.c.b16 %v765, %v764
      %v811 = vpack.c.b16 %v767, %v766
      %v812 = vpack.c.b16 %v769, %v768
      %v813 = vpack.c.b16 %v771, %v770
      %v814 = vpack.c.b16 %v773, %v772
      %v815 = vpack.c.b16 %v775, %v774
      %v816 = vpack.c.b16 %v777, %v776
      %v817 = vpack.c.b16 %v779, %v778
      %v818 = vpack.c.b16 %v781, %v780
      %v819 = vpack.c.b16 %v783, %v782
      %v820 = vpack.c.b16 %v785, %v784
      %v821 = vpack.c.b16 %v787, %v786
      %v822 = vpack.c.b16 %v789, %v788
      %v823 = vpack.c.b16 %v791, %v790
      %v824 = vpack.c.b16 %v793, %v792
      %v825 = vpack.c.b16 %v795, %v794
      %v826 = vpack.c.b16 %v797, %v796
      %v827 = vpack.c.b16 %v799, %v798
      %v828 = vpack.c.b16 %v801, %v800
      %v829 = vpack.c.b16 %v803, %v802
      %v830 = vpack.c.b16 %v805, %v804
      %v831 = vpack.c.b16 %v807, %v806
      %856 = vmatprep.subr.bf16.mxu0 0
      %857 = vmatpush1.bf16.msra.mxu0 %v808
      %858 = vmatprep.subr.bf16.mxu0 0
      %859 = vmatpush1.bf16.msra.mxu0 %v809
      %860 = vmatprep.subr.bf16.mxu0 0
      %861 = vmatpush1.bf16.msra.mxu0 %v810
      %862 = vmatprep.subr.bf16.mxu0 0
      %863 = vmatpush1.bf16.msra.mxu0 %v811
      %864 = vmatprep.subr.bf16.mxu0 0
      %865 = vmatpush1.bf16.msra.mxu0 %v812
      %866 = vmatprep.subr.bf16.mxu0 0
      %867 = vmatpush1.bf16.msra.mxu0 %v813
      %868 = vmatprep.subr.bf16.mxu0 0
      %869 = vmatpush1.bf16.msra.mxu0 %v814
      %870 = vmatprep.subr.bf16.mxu0 0
      %871 = vmatpush1.bf16.msra.mxu0 %v815
      %872 = vmatprep.subr.bf16.mxu0 0
      %873 = vmatpush1.bf16.msra.mxu0 %v816
      %874 = vmatprep.subr.bf16.mxu0 0
      %875 = vmatpush1.bf16.msra.mxu0 %v817
      %876 = vmatprep.subr.bf16.mxu0 0
      %877 = vmatpush1.bf16.msra.mxu0 %v818
      %878 = vmatprep.subr.bf16.mxu0 0
      %879 = vmatpush1.bf16.msra.mxu0 %v819
      %880 = vmatprep.subr.bf16.mxu0 0
      %881 = vmatpush1.bf16.msra.mxu0 %v820
      %882 = vmatprep.subr.bf16.mxu0 0
      %883 = vmatpush1.bf16.msra.mxu0 %v821
      %884 = vmatprep.subr.bf16.mxu0 0
      %885 = vmatpush1.bf16.msra.mxu0 %v822
      %886 = vmatprep.subr.bf16.mxu0 0
      %887 = vmatpush1.bf16.msra.mxu0 %v823
      %888 = vmatprep.mubr.bf16.mxu0 %v652
      %889 = vmatmul.mubr.bf16.gmra.mrb[0].mxu0 %v651
      %v890 = vpop.f32.mrb[0].mxu0
      %v891 = vadd.f32 %v710, %v890
      %v892 = vpop.f32.mrb[0].mxu0
      %v893 = vpop.f32.mrb[0].mxu0
      %v894 = vadd.f32 %v710, %v893
      %v895 = vpop.f32.mrb[0].mxu0
      %896 = vmatprep.mubr.bf16.mxu0 %v655
      %897 = vmatmul.mubr.bf16.gmra.mrb[0].mxu0 %v654
      %v898 = vpop.f32.mrb[0].mxu0
      %v899 = vadd.f32 %v710, %v898
      %v900 = vpop.f32.mrb[0].mxu0
      %v901 = vpop.f32.mrb[0].mxu0
      %v902 = vadd.f32 %v710, %v901
      %v903 = vpop.f32.mrb[0].mxu0
      %904 = vdwg.mxu0
      %905 = vmatprep.subr.bf16.mxu0 0
      %906 = vmatpush1.bf16.msra.mxu0 %v824
      %907 = vmatprep.subr.bf16.mxu0 0
      %908 = vmatpush1.bf16.msra.mxu0 %v825
      %909 = vmatprep.subr.bf16.mxu0 0
      %910 = vmatpush1.bf16.msra.mxu0 %v826
      %911 = vmatprep.subr.bf16.mxu0 0
      %912 = vmatpush1.bf16.msra.mxu0 %v827
      %913 = vmatprep.subr.bf16.mxu0 0
      %914 = vmatpush1.bf16.msra.mxu0 %v828
      %915 = vmatprep.subr.bf16.mxu0 0
      %916 = vmatpush1.bf16.msra.mxu0 %v829
      %917 = vmatprep.subr.bf16.mxu0 0
      %918 = vmatpush1.bf16.msra.mxu0 %v830
      %919 = vmatprep.subr.bf16.mxu0 0
      %920 = vmatpush1.bf16.msra.mxu0 %v831
      %921 = vmatprep.subr.bf16.mxu0 0
      %922 = vmatpush1.bf16.msra.mxu0 0
      %923 = vmatprep.subr.bf16.mxu0 0
      %924 = vmatpush1.bf16.msra.mxu0 0
      %925 = vmatprep.subr.bf16.mxu0 0
      %926 = vmatpush1.bf16.msra.mxu0 0
      %927 = vmatprep.subr.bf16.mxu0 0
      %928 = vmatpush1.bf16.msra.mxu0 0
      %929 = vmatprep.subr.bf16.mxu0 0
      %930 = vmatpush1.bf16.msra.mxu0 0
      %931 = vmatprep.subr.bf16.mxu0 0
      %932 = vmatpush1.bf16.msra.mxu0 0
      %933 = vmatprep.subr.bf16.mxu0 0
      %934 = vmatpush1.bf16.msra.mxu0 0
      %935 = vmatprep.subr.bf16.mxu0 0
      %936 = vmatpush1.bf16.msra.mxu0 0
      %937 = vmatprep.mubr.bf16.mxu0 0
      %938 = vmatmul.mubr.bf16.gmra.mrb[0].mxu0 %v653
      %v939 = vpop.f32.mrb[0].mxu0
      %v940 = vadd.f32 %v891, %v939
      %v941 = vpop.f32.mrb[0].mxu0
      %v942 = vpop.f32.mrb[0].mxu0
      %v943 = vadd.f32 %v894, %v942
      %v944 = vpop.f32.mrb[0].mxu0
      %945 = vmatprep.mubr.bf16.mxu0 0
      %946 = vmatmul.mubr.bf16.gmra.mrb[0].mxu0 %v656
      %v947 = vpop.f32.mrb[0].mxu0
      %v948 = vadd.f32 %v899, %v947
      %v949 = vpop.f32.mrb[0].mxu0
      %v950 = vpop.f32.mrb[0].mxu0
      %v951 = vadd.f32 %v902, %v950
      %v952 = vpop.f32.mrb[0].mxu0
      %953 = vdwg.mxu0
      %v954 = vadd.f32 %v940, %v229
      %v955 = vadd.f32 %v943, %v230
      %v956 = vadd.f32 %v948, %v231
      %v957 = vadd.f32 %v951, %v232
      %v958 = vmax.f32 %v954, 0.0
      %v959 = vmax.f32 %v955, 0.0
      %v960 = vmax.f32 %v956, 0.0
      %v961 = vmax.f32 %v957, 0.0
      %962 = vst [vmem:[%s226] sm:$0xff] %v958
      %963 = vst [vmem:[%s226 + $0x8] sm:$0xff] %v959
      %964 = vst [vmem:[%s226 + $0x10] sm:$0xff] %v960
      %965 = vst [vmem:[%s226 + $0x18] sm:$0xff] %v961
      %s966 = smul.u32 4, %s16
      %p967 = scmp.lt.s32.totalorder %s966, 7
      %s968 = scalar_select %p967, %s966, 7
      %s969 = smul.addr %s968, 8
      %s970 = scalar_lea.vmem %s5, %s969
      // Predicated region
      $region41: #{basic_block_forward.1} parent=39 // pred_check
        %p971 = pneg %p144
      $region42: #{basic_block_forward.1} parent=39 // pred_check_branch
        %973 = sbr.rel (%p971) target = $region44
      $region43: #{basic_block_forward.1} parent=39 // pred_region
        %s974 = smul.u32 4, %s16
      $region44: #{basic_block_forward.1} parent=39 // pred_fallthru
        _
    $region40: #{basic_block_forward.1} parent=5 // pred_fallthru
      _
    %p975 = scmp.le.s32.totalorder 2, %s11
    // Predicated region
    $region45: #{basic_block_forward.1} parent=5 // pred_check
      %p976 = pneg %p975
    $region46: #{basic_block_forward.1} parent=5 // pred_check_branch
      %978 = sbr.rel (%p976) target = $region48
    $region47: #{basic_block_forward.1} parent=5 // pred_region
      %s979 = ssub.s32 %s11, 2
      // Predicated region
      $region49: #{basic_block_forward.1} parent=47 // pred_check
        %p980 = pneg %p150
      $region50: #{basic_block_forward.1} parent=47 // pred_check_branch
        %982 = sbr.rel (%p980) target = $region52
      $region51: #{basic_block_forward.1} parent=47 // pred_region
        %s983 = smul.u32 4, %s17
        %p984 = scmp.lt.s32.totalorder %s983, 7
        %s985 = scalar_select %p984, %s983, 7
        %s986 = smul.addr %s985, 8
        %s987 = scalar_lea.vmem %s5, %s986
      $region52: #{basic_block_forward.1} parent=47 // pred_fallthru
        _
    $region48: #{basic_block_forward.1} parent=5 // pred_fallthru
      _
  $region6: #{basic_block_forward.1} parent=0 // loop_footer
    %s15 = sadd.s32 1, %s11
  $region7: #{basic_block_forward.1} parent=0 // loop_footer_branch
    %10 = sbr.rel target = $region3
  $region8: #{basic_block_forward.1} parent=0 // loop_exit
    _

</llo_original>
